<compile_context>
chip_gen: v7x
topology: tpu7x:2x2x1
jax: 0.10.0
libtpu: 0.0.40
codegen_flags: <defaults>
</compile_context>

<pallas_src>
import jax
import jax.numpy as jnp
from jax.experimental import pallas as pl
from jax.experimental.pallas import tpu as pltpu

_LANES = 128


def _mish_kernel(x_ref, o_ref):
    """Elementwise Mish on one (block_rows, 128) VMEM tile."""
    x = x_ref[...].astype(jnp.float32)

    # u = exp(x), clamped so it never overflows; for x >= 20, t/(t+2) == 1.0 in
    # f32 and the result is exactly x, matching x*tanh(softplus(x)).
    u = jnp.exp(jnp.minimum(x, 20.0))
    t = u * (u + 2.0)                       # (1+e^x)^2 - 1
    d = t + 2.0                             # (1+e^x)^2 + 1

    # tanh(softplus(x)) = t / d.  EUP approx reciprocal + one Newton step on the
    # VPU (hidden under the memory/EUP-bound pipeline) gives ~f32 accuracy.
    r = pl.reciprocal(d, approx=True)
    r = r * (2.0 - d * r)

    o_ref[...] = (x * t * r).astype(o_ref.dtype)


def _round_up(a, b):
    return pl.cdiv(a, b) * b


def _chip_config():
    """Per-generation (tile_bytes, vmem_limit_bytes, is_v7x)."""
    kind = ""
    try:
        kind = jax.devices()[0].device_kind.lower()
    except Exception:
        pass
    vmem_cap = None
    try:
        vmem_cap = pltpu.get_tpu_info().vmem_capacity_bytes
    except Exception:
        pass

    is_v7 = ("v7" in kind) or (vmem_cap is not None and vmem_cap <= 80 * 1024 * 1024)
    if is_v7:
        # v7x: 64 MiB physical VMEM -> 4 MiB tile, 16 MiB double-buffered WS.
        return 4 * 1024 * 1024, 32 * 1024 * 1024, True
    # v5e / v6e: 128 MiB physical VMEM -> 8 MiB tile, 32 MiB WS.
    return 8 * 1024 * 1024, 48 * 1024 * 1024, False


def mish(x):
    """Mish(x) for an arbitrarily shaped float array, layout agnostic."""
    orig_shape = x.shape
    orig_dtype = x.dtype
    n = x.size

    itemsize = x.dtype.itemsize
    # Native sublane tile: 8 rows for 32-bit, 16 for 16-bit, 32 for 8-bit.
    min_rows = max(8, 32 // itemsize)

    tile_bytes, vmem_limit, is_v7 = _chip_config()
    max_block_rows = max(
        min_rows,
        (tile_bytes // (_LANES * itemsize)) // min_rows * min_rows,
    )

    # Flatten to a lane-dense 2-D slab: last dim = 128 lanes (unmasked vst).
    flat = x.reshape(-1)
    rows = pl.cdiv(n, _LANES)
    tail_pad = rows * _LANES - n            # < 128 elems; 0 for aligned sizes
    if tail_pad:
        flat = jnp.pad(flat, (0, tail_pad))
    x2 = flat.reshape(rows, _LANES)

    block_rows = min(max_block_rows, _round_up(rows, min_rows))
    grid = (pl.cdiv(rows, block_rows),)     # partial last block handled by Pallas

    # Megacore: real 2-TC split on v7x (only when the grid splits evenly);
    # plain "parallel" elsewhere (no-op on the 1-TC v5e/v6e).
    if is_v7 and grid[0] % 2 == 0:
        dim_sem = (pltpu.CORE_PARALLEL,)
    else:
        dim_sem = ("parallel",)

    out2 = pl.pallas_call(
        _mish_kernel,
        out_shape=jax.ShapeDtypeStruct((rows, _LANES), orig_dtype),
        grid=grid,
        in_specs=[pl.BlockSpec((block_rows, _LANES), lambda i: (i, 0))],
        out_specs=pl.BlockSpec((block_rows, _LANES), lambda i: (i, 0)),
        compiler_params=pltpu.CompilerParams(
            dimension_semantics=dim_sem,
            vmem_limit_bytes=vmem_limit,
        ),
    )(x2)

    out = out2.reshape(-1)
    if tail_pad:
        out = out[:n]
    return out.reshape(orig_shape)


def _reference(x):
    """Pure-JAX reference mirroring the PyTorch forward."""
    return x * jnp.tanh(jax.nn.softplus(x))


if __name__ == "__main__":
    key = jax.random.PRNGKey(0)
    x = jax.random.normal(key, (2, 4, 16, 16), jnp.float32)

    out = jax.block_until_ready(mish(x))
    ref = jax.block_until_ready(_reference(x))

    assert out.shape == x.shape
    assert jnp.allclose(out, ref, rtol=1e-4, atol=1e-4), float(
        jnp.max(jnp.abs(out - ref)))

    print("KERNEL_OK")
</pallas_src>

<mosaic_0001>
module attributes {stable_mosaic.version = 11 : i64} {
  func.func @_mish_kernel(%arg0: i32, %arg1: memref<16x128xf32, #tpu.memory_space<vmem>>, %arg2: memref<16x128xf32, #tpu.memory_space<vmem>>) attributes {dimension_semantics = [#tpu.dimension_semantics<parallel>], iteration_bounds = array<i64: 1>, scalar_prefetch = 0 : i64, scratch_operands = 0 : i64, tpu.core_type = #tpu.core_type<tc>, window_params = [{transform_indices = @transform_0, window_bounds = array<i64: 16, 128>}, {transform_indices = @transform_1, window_bounds = array<i64: 16, 128>}]} {
    %c0 = arith.constant 0 : index
    %c0_0 = arith.constant 0 : index
    %0 = vector.load %arg1[%c0, %c0_0] : memref<16x128xf32, #tpu.memory_space<vmem>>, vector<16x128xf32>
    %cst = arith.constant 2.000000e+01 : f32
    %1 = vector.broadcast %cst : f32 to vector<16x128xf32>
    %2 = arith.minimumf %0, %1 : vector<16x128xf32>
    %3 = math.exp %2 : vector<16x128xf32>
    %cst_1 = arith.constant 2.000000e+00 : f32
    %4 = vector.broadcast %cst_1 : f32 to vector<16x128xf32>
    %5 = arith.addf %3, %4 : vector<16x128xf32>
    %6 = arith.mulf %3, %5 : vector<16x128xf32>
    %cst_2 = arith.constant 2.000000e+00 : f32
    %7 = vector.broadcast %cst_2 : f32 to vector<16x128xf32>
    %8 = arith.addf %6, %7 : vector<16x128xf32>
    %9 = tpu.reciprocal %8 {approx = true} : vector<16x128xf32> -> vector<16x128xf32>
    %10 = arith.mulf %8, %9 : vector<16x128xf32>
    %cst_3 = arith.constant 2.000000e+00 : f32
    %11 = vector.broadcast %cst_3 : f32 to vector<16x128xf32>
    %12 = arith.subf %11, %10 : vector<16x128xf32>
    %13 = arith.mulf %9, %12 : vector<16x128xf32>
    %14 = arith.mulf %0, %6 : vector<16x128xf32>
    %15 = arith.mulf %14, %13 : vector<16x128xf32>
    %c0_4 = arith.constant 0 : index
    %c0_5 = arith.constant 0 : index
    %16 = vector.load %arg2[%c0_4, %c0_5] : memref<16x128xf32, #tpu.memory_space<vmem>>, vector<16x128xf32>
    tpu.vector_store %arg2[%c0_4, %c0_5], %15 {strides = array<i32>} : memref<16x128xf32, #tpu.memory_space<vmem>>, vector<16x128xf32>,
    return
  }
  func.func @transform_0(%arg0: i32) -> (i32, i32) {
    %c0_i32 = arith.constant 0 : i32
    %c0_i32_0 = arith.constant 0 : i32
    return %arg0, %c0_i32 : i32, i32
  }
  func.func @transform_1(%arg0: i32) -> (i32, i32) {
    %c0_i32 = arith.constant 0 : i32
    %c0_i32_0 = arith.constant 0 : i32
    return %arg0, %c0_i32 : i32, i32
  }
}

</mosaic_0001>

<llo_original>
// kernel: tpu_custom_call.1
$region0: #{tpu_custom_call.1}
  #allocation0 [shape = 'u32[]', space=smem, size = 0x4, offset = 0x4, fixed_abs, tag = 'smem constant byte address 0x4 - core index']
  #allocation1 [shape = 'u32[144,128]{1,0:T(1,128)}', space=vmem, size = 0x12000, scoped, tag = 'internal scratch']
  %s0 = inlined_call_operand.hbm [shape: f32[16,128], index: 0, kind: input, shape index: {}]
  %s1 = inlined_call_operand.hbm [shape: f32[16,128], index: 1, kind: output, shape index: {}]
  %s2 = sld [smem:[#allocation0]]
  $region18: #{tpu_custom_call.1} parent=0
    _
  %s4 = ssub.s32 1, %s2
  %s5 = scalar_select 0, %s4, %s2
  $region1: #{tpu_custom_call.1} parent=0
    #allocation2 [shape = 'u8[8192]{0}', space=vmem, size = 0x2000, scoped, tag = 'input window, operand 0, single buffered']
    #allocation3 [shape = 's32[1]{0}', space=sflag, size = 0x4, scoped, tag = 'scoped memory for tpu_custom_call.1']
    #allocation4 [shape = 's32[1]{0}', space=sflag, size = 0x4, scoped, tag = 'scoped memory for tpu_custom_call.1']
    #allocation5 [shape = 'u8[8192]{0}', space=vmem, size = 0x2000, scoped, tag = 'output window, operand 0, single buffered']
    %6 = vsyncpa [#allocation3], 0
    %7 = vsyncpa [#allocation4], 0
    // Predicated region
    $region2: #{tpu_custom_call.1} parent=1 // pred_check
      _
    $region3: #{tpu_custom_call.1} parent=1 // pred_check_branch
      %9 = sbr.rel (0) target = $region5
    $region4: #{tpu_custom_call.1} parent=1 // pred_region
      %s11 = ssub.s32 256, 256
      %12 = vsyncadd [#allocation3], %s11
      %s13 = sshll.u32 [#allocation2], 4
      %s14 = int_to_ptr.vmem [resolvable:$true] %s13
      %19 = dma.hbm_to_vmem [thread:$0]  %s0, 256, %s14, [#allocation3], 128, 128, 8
    $region5: #{tpu_custom_call.1} parent=1 // pred_fallthru
      _
    // Predicated region
    $region6: #{tpu_custom_call.1} parent=1 // pred_check
      _
    $region7: #{tpu_custom_call.1} parent=1 // pred_check_branch
      %21 = sbr.rel (0) target = $region9
    $region8: #{tpu_custom_call.1} parent=1 // pred_region
      %22 = dma.done [#allocation3], 256
    $region9: #{tpu_custom_call.1} parent=1 // pred_fallthru
      _
    %v23 = vld [vmem:[#allocation2] sm:$0xff]
    %v24 = vld [vmem:[#allocation2 + $0x8] sm:$0xff]
    %v25 = vmin.f32 %v23, 20.0
    %v26 = vmin.f32 %v24, 20.0
    %v27 = vmul.f32 %v25, 1.442695
    %v28 = vpow.pop %v27
    %v29 = vmul.f32 %v26, 1.442695
    %v30 = vpow.pop %v29
    %v31 = vadd.f32 %v28, 2.0
    %v32 = vadd.f32 %v30, 2.0
    %v33 = vmul.f32 %v28, %v31
    %v34 = vmul.f32 %v30, %v32
    %v35 = vadd.f32 %v33, 2.0
    %v36 = vadd.f32 %v34, 2.0
    %v37 = vrcp.pop %v35
    %v38 = vrcp.pop %v36
    %v39 = vmul.f32 %v35, %v37
    %v40 = vmul.f32 %v36, %v38
    %v41 = vsub.f32 2.0, %v39
    %v42 = vsub.f32 2.0, %v40
    %v43 = vmul.f32 %v37, %v41
    %v44 = vmul.f32 %v38, %v42
    %v45 = vmul.f32 %v23, %v33
    %v46 = vmul.f32 %v24, %v34
    %v47 = vmul.f32 %v45, %v43
    %v48 = vmul.f32 %v46, %v44
    %49 = vst [vmem:[#allocation5] sm:$0xff] %v47
    %50 = vst [vmem:[#allocation5 + $0x8] sm:$0xff] %v48
    // Predicated region
    $region10: #{tpu_custom_call.1} parent=1 // pred_check
      _
    $region11: #{tpu_custom_call.1} parent=1 // pred_check_branch
      %52 = sbr.rel (0) target = $region13
    $region12: #{tpu_custom_call.1} parent=1 // pred_region
      %s54 = ssub.s32 256, 256
      %55 = vsyncadd [#allocation4], %s54
      %s56 = sshll.u32 [#allocation5], 4
      %s57 = int_to_ptr.vmem [resolvable:$true] %s56
      %62 = dma.vmem_to_hbm [thread:$0]  %s57, 256, %s1, [#allocation4], 128, 128, 8
    $region13: #{tpu_custom_call.1} parent=1 // pred_fallthru
      _
    // Predicated region
    $region14: #{tpu_custom_call.1} parent=1 // pred_check
      _
    $region15: #{tpu_custom_call.1} parent=1 // pred_check_branch
      %64 = sbr.rel (0) target = $region17
    $region16: #{tpu_custom_call.1} parent=1 // pred_region
      %65 = dma.done [#allocation4], 256
    $region17: #{tpu_custom_call.1} parent=1 // pred_fallthru
      _
    %66 = vsyncpa [#allocation3], 1
    %67 = vsyncpa [#allocation4], 1

</llo_original>
